<compile_context>
chip_gen: v5e
topology: v5e:2x2
jax: 0.10.0
libtpu: 0.0.40
codegen_flags: <defaults>
</compile_context>

<pallas_src>
import functools

import numpy as np
import jax
import jax.numpy as jnp
from jax.experimental import pallas as pl
from jax.experimental.pallas import tpu as pltpu

SINGLE_FUNCS = ["identity", "identity", "square", "sin", "cos", "sigmoid"]
N_SINGLE = len(SINGLE_FUNCS)          # 6
N_DOUBLE = 2                          # two product units
N_FUNCS = N_SINGLE + N_DOUBLE         # 8   (output width of a symbolic layer)
FUNC_IN_DIM = N_FUNCS + N_DOUBLE      # 10  (width of the inner Linear)

LANES = 128
SUBLANES = 8
WIDE = 2 * LANES                      # 256 = [ left half | right half ]
TILE_B_MAX = 512                      # batch tile; comfortable for 32 MiB VMEM


# ---------------------------------------------------------------------------
# Constant mask (built once at import; rows select the activation per lane):
#   rows: 0=identity, 1=square, 2=sin, 3=cos, 4=sigmoid, 5=product
# ---------------------------------------------------------------------------
def _build_mask():
    m = np.zeros((SUBLANES, LANES), np.float32)
    row = {"identity": 0, "square": 1, "sin": 2, "cos": 3, "sigmoid": 4}
    for col, fname in enumerate(SINGLE_FUNCS):
        m[row[fname], col] = 1.0
    for j in range(N_DOUBLE):
        m[5, N_SINGLE + j] = 1.0
    return m


_MASK_NP = _build_mask()


# ---------------------------------------------------------------------------
# Fused Pallas kernel: depth symbolic layers + final linear, one batch tile.
# ---------------------------------------------------------------------------
def _fused_symbolic_net_kernel(x_ref, w_ref, b_ref, mask_ref, out_ref, *, depth):
    m_id = mask_ref[0:1, :]
    m_sq = mask_ref[1:2, :]
    m_sin = mask_ref[2:3, :]
    m_cos = mask_ref[3:4, :]
    m_sig = mask_ref[4:5, :]
    m_prod = mask_ref[5:6, :]

    h = x_ref[...]
    for l in range(depth):                       # static unrolled layer loop
        g2 = jnp.dot(h, w_ref[l], preferred_element_type=jnp.float32) + b_ref[l]
        gL = g2[:, :LANES]                       # singles + product LEFT operands
        gR = g2[:, LANES:]                       # product RIGHT operands (lanes 6..7)
        h = (m_id * gL
             + m_sq * (gL * gL)
             + m_sin * jnp.sin(gL)
             + m_cos * jnp.cos(gL)
             + m_sig * (0.5 * (jnp.tanh(0.5 * gL) + 1.0))   # == sigmoid(gL)
             + m_prod * (gL * gR))
    gf = jnp.dot(h, w_ref[depth], preferred_element_type=jnp.float32) + b_ref[depth]
    out_ref[...] = gf[:, :LANES]


# ---------------------------------------------------------------------------
# Weight folding / padding helpers (wrapper-side, plain JAX)
# ---------------------------------------------------------------------------
def _fold_symbolic_layer(W, b):
    """Fold a SymbolicLayer's (in_dim, 10) weight into a (128, 256) matrix:
    left half -> single-func inputs in lanes 0..5 + product LEFT operands in
    lanes 6..7; right half -> product RIGHT operands in lanes 128+6..128+7."""
    in_dim = W.shape[0]
    W = W.astype(jnp.float32)
    b = b.astype(jnp.float32)
    Wp = jnp.zeros((LANES, WIDE), jnp.float32)
    bp = jnp.zeros((1, WIDE), jnp.float32)
    Wp = Wp.at[:in_dim, :N_SINGLE].set(W[:, :N_SINGLE])
    bp = bp.at[0, :N_SINGLE].set(b[:N_SINGLE])
    for j in range(N_DOUBLE):
        li = N_SINGLE + 2 * j          # source column of the left operand
        ri = li + 1                    # source column of the right operand
        Wp = Wp.at[:in_dim, N_SINGLE + j].set(W[:, li])
        bp = bp.at[0, N_SINGLE + j].set(b[li])
        Wp = Wp.at[:in_dim, LANES + N_SINGLE + j].set(W[:, ri])
        bp = bp.at[0, LANES + N_SINGLE + j].set(b[ri])
    return Wp, bp


def _fold_final_linear(W, b):
    in_dim, out_dim = W.shape
    Wp = jnp.zeros((LANES, WIDE), jnp.float32)
    bp = jnp.zeros((1, WIDE), jnp.float32)
    Wp = Wp.at[:in_dim, :out_dim].set(W.astype(jnp.float32))
    bp = bp.at[0, :out_dim].set(b.astype(jnp.float32))
    return Wp, bp


# ---------------------------------------------------------------------------
# Forward pass: one pallas_call for the whole network
# ---------------------------------------------------------------------------
def symbolic_net_forward(params, x):
    depth = len(params) - 1
    B, in_dim = x.shape
    out_dim = params[-1][0].shape[1]

    # batch padding / tiling
    B8 = ((B + SUBLANES - 1) // SUBLANES) * SUBLANES
    tile_b = min(TILE_B_MAX, B8)
    n_tiles = pl.cdiv(B8, tile_b)
    B_pad = n_tiles * tile_b

    # stack folded per-layer weights: (depth+1, 128, 256) / (depth+1, 1, 256)
    ws, bs = [], []
    for (W, b) in params[:-1]:
        Wp, bp = _fold_symbolic_layer(W, b)
        ws.append(Wp)
        bs.append(bp)
    Wp, bp = _fold_final_linear(*params[-1])
    ws.append(Wp)
    bs.append(bp)
    w_stack = jnp.stack(ws, axis=0)
    b_stack = jnp.stack(bs, axis=0)
    mask = jnp.asarray(_MASK_NP)

    x_p = jnp.zeros((B_pad, LANES), jnp.float32).at[:B, :in_dim].set(
        x.astype(jnp.float32))

    kernel = functools.partial(_fused_symbolic_net_kernel, depth=depth)
    out = pl.pallas_call(
        kernel,
        out_shape=jax.ShapeDtypeStruct((B_pad, LANES), jnp.float32),
        grid=(n_tiles,),
        in_specs=[
            pl.BlockSpec((tile_b, LANES), lambda i: (i, 0)),                  # x tile
            pl.BlockSpec((depth + 1, LANES, WIDE), lambda i: (0, 0, 0)),      # weights (resident)
            pl.BlockSpec((depth + 1, 1, WIDE), lambda i: (0, 0, 0)),          # biases  (resident)
            pl.BlockSpec((SUBLANES, LANES), lambda i: (0, 0)),                # mask    (resident)
        ],
        out_specs=pl.BlockSpec((tile_b, LANES), lambda i: (i, 0)),
        compiler_params=pltpu.CompilerParams(
            dimension_semantics=("parallel",),          # megacore sharding
            vmem_limit_bytes=32 * 1024 * 1024,
        ),
    )(x_p, w_stack, b_stack, mask)
    return out[:B, :out_dim]


# ---------------------------------------------------------------------------
# Deterministic parameter init matching the PyTorch module's shapes
# ---------------------------------------------------------------------------
def init_params(key, symbolic_depth, in_dim, out_dim):
    params = []
    dim = in_dim
    for _ in range(symbolic_depth):
        key, k1, k2 = jax.random.split(key, 3)
        W = jax.random.normal(k1, (dim, FUNC_IN_DIM), jnp.float32) * 0.5
        b = jax.random.normal(k2, (FUNC_IN_DIM,), jnp.float32) * 0.1
        params.append((W, b))
        dim = N_FUNCS
    key, k1, k2 = jax.random.split(key, 3)
    Wf = jax.random.normal(k1, (dim, out_dim), jnp.float32) * 0.5
    bf = jax.random.normal(k2, (out_dim,), jnp.float32) * 0.1
    params.append((Wf, bf))
    return params


# ---------------------------------------------------------------------------
# Pure-JAX reference (mirrors the PyTorch forward exactly)
# ---------------------------------------------------------------------------
def symbolic_net_ref(params, x):
    h = x.astype(jnp.float32)
    for (W, b) in params[:-1]:
        g = h @ W + b
        outs = []
        in_i = 0
        for fname in SINGLE_FUNCS:
            col = g[:, in_i]
            if fname == "identity":
                outs.append(col)
            elif fname == "square":
                outs.append(col * col)
            elif fname == "sin":
                outs.append(jnp.sin(col))
            elif fname == "cos":
                outs.append(jnp.cos(col))
            elif fname == "sigmoid":
                outs.append(jax.nn.sigmoid(col))
            in_i += 1
        for _ in range(N_DOUBLE):
            outs.append(g[:, in_i] * g[:, in_i + 1])
            in_i += 2
        h = jnp.stack(outs, axis=1)
    Wf, bf = params[-1]
    return h @ Wf + bf


# ---------------------------------------------------------------------------
if __name__ == "__main__":
    key = jax.random.PRNGKey(0)
    k_param, k_x, k_x2 = jax.random.split(key, 3)

    symbolic_depth, in_dim, out_dim, batch = 2, 4, 1, 2
    params = init_params(k_param, symbolic_depth, in_dim, out_dim)
    x = jax.random.normal(k_x, (batch, in_dim), jnp.float32)

    fwd = jax.jit(symbolic_net_forward)

    out = jax.block_until_ready(fwd(params, x))
    ref = symbolic_net_ref(params, x)
    assert out.shape == (batch, out_dim)
    assert jnp.allclose(out, ref, atol=1e-4, rtol=1e-4), (out, ref)

    # second, non-multiple-of-8 batch to exercise padding / slicing
    x2 = jax.random.normal(k_x2, (13, in_dim), jnp.float32)
    out2 = jax.block_until_ready(fwd(params, x2))
    ref2 = symbolic_net_ref(params, x2)
    assert out2.shape == (13, out_dim)
    assert jnp.allclose(out2, ref2, atol=1e-4, rtol=1e-4), (out2, ref2)

    print("KERNEL_OK")
</pallas_src>

<mosaic_0001>
module attributes {stable_mosaic.version = 11 : i64} {
  func.func @_fused_symbolic_net_kernel(%arg0: i32, %arg1: memref<8x128xf32, #tpu.memory_space<vmem>>, %arg2: memref<3x128x256xf32, #tpu.memory_space<vmem>>, %arg3: memref<3x1x256xf32, #tpu.memory_space<vmem>>, %arg4: memref<8x128xf32, #tpu.memory_space<vmem>>, %arg5: memref<8x128xf32, #tpu.memory_space<vmem>>) attributes {dimension_semantics = [#tpu.dimension_semantics<parallel>], iteration_bounds = array<i64: 1>, scalar_prefetch = 0 : i64, scratch_operands = 0 : i64, tpu.core_type = #tpu.core_type<tc>, window_params = [{transform_indices = @transform_0, window_bounds = array<i64: 8, 128>}, {pipeline_mode = #tpu.pipeline_mode<synchronous>, transform_indices = @transform_1, window_bounds = array<i64: 3, 128, 256>}, {pipeline_mode = #tpu.pipeline_mode<synchronous>, transform_indices = @transform_2, window_bounds = array<i64: 3, 1, 256>}, {pipeline_mode = #tpu.pipeline_mode<synchronous>, transform_indices = @transform_3, window_bounds = array<i64: 8, 128>}, {transform_indices = @transform_4, window_bounds = array<i64: 8, 128>}]} {
    %c0 = arith.constant 0 : index
    %c0_0 = arith.constant 0 : index
    %0 = vector.load %arg4[%c0, %c0_0] : memref<8x128xf32, #tpu.memory_space<vmem>>, vector<1x128xf32>
    %c1 = arith.constant 1 : index
    %c0_1 = arith.constant 0 : index
    %1 = vector.load %arg4[%c1, %c0_1] : memref<8x128xf32, #tpu.memory_space<vmem>>, vector<1x128xf32>
    %c2 = arith.constant 2 : index
    %c0_2 = arith.constant 0 : index
    %2 = vector.load %arg4[%c2, %c0_2] : memref<8x128xf32, #tpu.memory_space<vmem>>, vector<1x128xf32>
    %c3 = arith.constant 3 : index
    %c0_3 = arith.constant 0 : index
    %3 = vector.load %arg4[%c3, %c0_3] : memref<8x128xf32, #tpu.memory_space<vmem>>, vector<1x128xf32>
    %c4 = arith.constant 4 : index
    %c0_4 = arith.constant 0 : index
    %4 = vector.load %arg4[%c4, %c0_4] : memref<8x128xf32, #tpu.memory_space<vmem>>, vector<1x128xf32>
    %c5 = arith.constant 5 : index
    %c0_5 = arith.constant 0 : index
    %5 = vector.load %arg4[%c5, %c0_5] : memref<8x128xf32, #tpu.memory_space<vmem>>, vector<1x128xf32>
    %c0_6 = arith.constant 0 : index
    %c0_7 = arith.constant 0 : index
    %6 = vector.load %arg1[%c0_6, %c0_7] : memref<8x128xf32, #tpu.memory_space<vmem>>, vector<8x128xf32>
    %c0_8 = arith.constant 0 : index
    %c0_9 = arith.constant 0 : index
    %c0_10 = arith.constant 0 : index
    %7 = vector.load %arg2[%c0_8, %c0_9, %c0_10] : memref<3x128x256xf32, #tpu.memory_space<vmem>>, vector<1x128x256xf32>
    %8 = vector.shape_cast %7 : vector<1x128x256xf32> to vector<128x256xf32>
    %cst = arith.constant dense<0.000000e+00> : vector<8x256xf32>
    %9 = tpu.matmul %6, %8, %cst {dimension_numbers = #tpu.dot_dimension_numbers<[1], [0], [0], [1], [0, 0, 1, 1], [], []>} : vector<8x128xf32>, vector<128x256xf32>, vector<8x256xf32> -> vector<8x256xf32>
    %c0_11 = arith.constant 0 : index
    %c0_12 = arith.constant 0 : index
    %c0_13 = arith.constant 0 : index
    %10 = vector.load %arg3[%c0_11, %c0_12, %c0_13] : memref<3x1x256xf32, #tpu.memory_space<vmem>>, vector<1x1x256xf32>
    %11 = vector.shape_cast %10 : vector<1x1x256xf32> to vector<1x256xf32>
    %12 = vector.broadcast %11 : vector<1x256xf32> to vector<8x256xf32>
    %13 = arith.addf %9, %12 : vector<8x256xf32>
    %14 = vector.extract_strided_slice %13 {offsets = [0, 0], sizes = [8, 128], strides = [1, 1]} : vector<8x256xf32> to vector<8x128xf32>
    %15 = vector.extract_strided_slice %13 {offsets = [0, 128], sizes = [8, 128], strides = [1, 1]} : vector<8x256xf32> to vector<8x128xf32>
    %16 = vector.broadcast %0 : vector<1x128xf32> to vector<8x128xf32>
    %17 = arith.mulf %16, %14 : vector<8x128xf32>
    %18 = arith.mulf %14, %14 : vector<8x128xf32>
    %19 = vector.broadcast %1 : vector<1x128xf32> to vector<8x128xf32>
    %20 = arith.mulf %19, %18 : vector<8x128xf32>
    %21 = arith.addf %17, %20 : vector<8x128xf32>
    %22 = math.sin %14 : vector<8x128xf32>
    %23 = vector.broadcast %2 : vector<1x128xf32> to vector<8x128xf32>
    %24 = arith.mulf %23, %22 : vector<8x128xf32>
    %25 = arith.addf %21, %24 : vector<8x128xf32>
    %26 = math.cos %14 : vector<8x128xf32>
    %27 = vector.broadcast %3 : vector<1x128xf32> to vector<8x128xf32>
    %28 = arith.mulf %27, %26 : vector<8x128xf32>
    %29 = arith.addf %25, %28 : vector<8x128xf32>
    %cst_14 = arith.constant 5.000000e-01 : f32
    %30 = vector.broadcast %cst_14 : f32 to vector<8x128xf32>
    %31 = arith.mulf %30, %14 : vector<8x128xf32>
    %32 = math.tanh %31 : vector<8x128xf32>
    %cst_15 = arith.constant 1.000000e+00 : f32
    %33 = vector.broadcast %cst_15 : f32 to vector<8x128xf32>
    %34 = arith.addf %32, %33 : vector<8x128xf32>
    %cst_16 = arith.constant 5.000000e-01 : f32
    %35 = vector.broadcast %cst_16 : f32 to vector<8x128xf32>
    %36 = arith.mulf %35, %34 : vector<8x128xf32>
    %37 = vector.broadcast %4 : vector<1x128xf32> to vector<8x128xf32>
    %38 = arith.mulf %37, %36 : vector<8x128xf32>
    %39 = arith.addf %29, %38 : vector<8x128xf32>
    %40 = arith.mulf %14, %15 : vector<8x128xf32>
    %41 = vector.broadcast %5 : vector<1x128xf32> to vector<8x128xf32>
    %42 = arith.mulf %41, %40 : vector<8x128xf32>
    %43 = arith.addf %39, %42 : vector<8x128xf32>
    %c1_17 = arith.constant 1 : index
    %c0_18 = arith.constant 0 : index
    %c0_19 = arith.constant 0 : index
    %44 = vector.load %arg2[%c1_17, %c0_18, %c0_19] : memref<3x128x256xf32, #tpu.memory_space<vmem>>, vector<1x128x256xf32>
    %45 = vector.shape_cast %44 : vector<1x128x256xf32> to vector<128x256xf32>
    %cst_20 = arith.constant dense<0.000000e+00> : vector<8x256xf32>
    %46 = tpu.matmul %43, %45, %cst_20 {dimension_numbers = #tpu.dot_dimension_numbers<[1], [0], [0], [1], [0, 0, 1, 1], [], []>} : vector<8x128xf32>, vector<128x256xf32>, vector<8x256xf32> -> vector<8x256xf32>
    %c1_21 = arith.constant 1 : index
    %c0_22 = arith.constant 0 : index
    %c0_23 = arith.constant 0 : index
    %47 = vector.load %arg3[%c1_21, %c0_22, %c0_23] : memref<3x1x256xf32, #tpu.memory_space<vmem>>, vector<1x1x256xf32>
    %48 = vector.shape_cast %47 : vector<1x1x256xf32> to vector<1x256xf32>
    %49 = vector.broadcast %48 : vector<1x256xf32> to vector<8x256xf32>
    %50 = arith.addf %46, %49 : vector<8x256xf32>
    %51 = vector.extract_strided_slice %50 {offsets = [0, 0], sizes = [8, 128], strides = [1, 1]} : vector<8x256xf32> to vector<8x128xf32>
    %52 = vector.extract_strided_slice %50 {offsets = [0, 128], sizes = [8, 128], strides = [1, 1]} : vector<8x256xf32> to vector<8x128xf32>
    %53 = vector.broadcast %0 : vector<1x128xf32> to vector<8x128xf32>
    %54 = arith.mulf %53, %51 : vector<8x128xf32>
    %55 = arith.mulf %51, %51 : vector<8x128xf32>
    %56 = vector.broadcast %1 : vector<1x128xf32> to vector<8x128xf32>
    %57 = arith.mulf %56, %55 : vector<8x128xf32>
    %58 = arith.addf %54, %57 : vector<8x128xf32>
    %59 = math.sin %51 : vector<8x128xf32>
    %60 = vector.broadcast %2 : vector<1x128xf32> to vector<8x128xf32>
    %61 = arith.mulf %60, %59 : vector<8x128xf32>
    %62 = arith.addf %58, %61 : vector<8x128xf32>
    %63 = math.cos %51 : vector<8x128xf32>
    %64 = vector.broadcast %3 : vector<1x128xf32> to vector<8x128xf32>
    %65 = arith.mulf %64, %63 : vector<8x128xf32>
    %66 = arith.addf %62, %65 : vector<8x128xf32>
    %cst_24 = arith.constant 5.000000e-01 : f32
    %67 = vector.broadcast %cst_24 : f32 to vector<8x128xf32>
    %68 = arith.mulf %67, %51 : vector<8x128xf32>
    %69 = math.tanh %68 : vector<8x128xf32>
    %cst_25 = arith.constant 1.000000e+00 : f32
    %70 = vector.broadcast %cst_25 : f32 to vector<8x128xf32>
    %71 = arith.addf %69, %70 : vector<8x128xf32>
    %cst_26 = arith.constant 5.000000e-01 : f32
    %72 = vector.broadcast %cst_26 : f32 to vector<8x128xf32>
    %73 = arith.mulf %72, %71 : vector<8x128xf32>
    %74 = vector.broadcast %4 : vector<1x128xf32> to vector<8x128xf32>
    %75 = arith.mulf %74, %73 : vector<8x128xf32>
    %76 = arith.addf %66, %75 : vector<8x128xf32>
    %77 = arith.mulf %51, %52 : vector<8x128xf32>
    %78 = vector.broadcast %5 : vector<1x128xf32> to vector<8x128xf32>
    %79 = arith.mulf %78, %77 : vector<8x128xf32>
    %80 = arith.addf %76, %79 : vector<8x128xf32>
    %c2_27 = arith.constant 2 : index
    %c0_28 = arith.constant 0 : index
    %c0_29 = arith.constant 0 : index
    %81 = vector.load %arg2[%c2_27, %c0_28, %c0_29] : memref<3x128x256xf32, #tpu.memory_space<vmem>>, vector<1x128x256xf32>
    %82 = vector.shape_cast %81 : vector<1x128x256xf32> to vector<128x256xf32>
    %cst_30 = arith.constant dense<0.000000e+00> : vector<8x256xf32>
    %83 = tpu.matmul %80, %82, %cst_30 {dimension_numbers = #tpu.dot_dimension_numbers<[1], [0], [0], [1], [0, 0, 1, 1], [], []>} : vector<8x128xf32>, vector<128x256xf32>, vector<8x256xf32> -> vector<8x256xf32>
    %c2_31 = arith.constant 2 : index
    %c0_32 = arith.constant 0 : index
    %c0_33 = arith.constant 0 : index
    %84 = vector.load %arg3[%c2_31, %c0_32, %c0_33] : memref<3x1x256xf32, #tpu.memory_space<vmem>>, vector<1x1x256xf32>
    %85 = vector.shape_cast %84 : vector<1x1x256xf32> to vector<1x256xf32>
    %86 = vector.broadcast %85 : vector<1x256xf32> to vector<8x256xf32>
    %87 = arith.addf %83, %86 : vector<8x256xf32>
    %88 = vector.extract_strided_slice %87 {offsets = [0, 0], sizes = [8, 128], strides = [1, 1]} : vector<8x256xf32> to vector<8x128xf32>
    %c0_34 = arith.constant 0 : index
    %c0_35 = arith.constant 0 : index
    %89 = vector.load %arg5[%c0_34, %c0_35] : memref<8x128xf32, #tpu.memory_space<vmem>>, vector<8x128xf32>
    tpu.vector_store %arg5[%c0_34, %c0_35], %88 {strides = array<i32>} : memref<8x128xf32, #tpu.memory_space<vmem>>, vector<8x128xf32>,
    return
  }
  func.func @transform_0(%arg0: i32) -> (i32, i32) {
    %c0_i32 = arith.constant 0 : i32
    %c0_i32_0 = arith.constant 0 : i32
    return %arg0, %c0_i32 : i32, i32
  }
  func.func @transform_1(%arg0: i32) -> (i32, i32, i32) {
    %c0_i32 = arith.constant 0 : i32
    %c0_i32_0 = arith.constant 0 : i32
    %c0_i32_1 = arith.constant 0 : i32
    %c0_i32_2 = arith.constant 0 : i32
    return %c0_i32, %c0_i32_0, %c0_i32_1 : i32, i32, i32
  }
  func.func @transform_2(%arg0: i32) -> (i32, i32, i32) {
    %c0_i32 = arith.constant 0 : i32
    %c0_i32_0 = arith.constant 0 : i32
    %c0_i32_1 = arith.constant 0 : i32
    %c0_i32_2 = arith.constant 0 : i32
    return %c0_i32, %c0_i32_0, %c0_i32_1 : i32, i32, i32
  }
  func.func @transform_3(%arg0: i32) -> (i32, i32) {
    %c0_i32 = arith.constant 0 : i32
    %c0_i32_0 = arith.constant 0 : i32
    %c0_i32_1 = arith.constant 0 : i32
    return %c0_i32, %c0_i32_0 : i32, i32
  }
  func.func @transform_4(%arg0: i32) -> (i32, i32) {
    %c0_i32 = arith.constant 0 : i32
    %c0_i32_0 = arith.constant 0 : i32
    return %arg0, %c0_i32 : i32, i32
  }
}

</mosaic_0001>

<llo_original>
// kernel: symbolic_net_forward.1
$region0: #{symbolic_net_forward.1}
  #allocation0 [shape = 'u32[]', space=smem, size = 0x4, offset = 0x4, fixed_abs, tag = 'smem constant byte address 0x4 - core index']
  #allocation1 [shape = 'u32[72,128]{1,0:T(1,128)}', space=vmem, size = 0x9000, scoped, tag = 'internal scratch']
  %s0 = inlined_call_operand.vmem [shape: f32[8,128], index: 0, kind: input, shape index: {}]
  %s1 = inlined_call_operand.vmem [shape: f32[3,128,256], index: 1, kind: input, shape index: {}]
  %s2 = inlined_call_operand.vmem [shape: f32[3,1,256], index: 2, kind: input, shape index: {}]
  %s3 = inlined_call_operand.vmem [shape: f32[8,128], index: 3, kind: input, shape index: {}]
  %s4 = inlined_call_operand.vmem [shape: f32[8,128], index: 4, kind: output, shape index: {}]
  %s5 = sld [smem:[#allocation0]]
  $region26: #{symbolic_net_forward.1} parent=0
    _
  %s7 = ssub.s32 1, %s5
  %s8 = scalar_select 0, %s7, %s5
  // Predicated region
  $region2: #{symbolic_net_forward.1} parent=0 // pred_check
    _
  $region3: #{symbolic_net_forward.1} parent=0 // pred_check_branch
    %10 = sbr.rel (0) target = $region5
  $region4: #{symbolic_net_forward.1} parent=0 // pred_region
    _
  $region5: #{symbolic_net_forward.1} parent=0 // pred_fallthru
    _
  // Predicated region
  $region6: #{symbolic_net_forward.1} parent=0 // pred_check
    _
  $region7: #{symbolic_net_forward.1} parent=0 // pred_check_branch
    %12 = sbr.rel (0) target = $region9
  $region8: #{symbolic_net_forward.1} parent=0 // pred_region
    _
  $region9: #{symbolic_net_forward.1} parent=0 // pred_fallthru
    _
  // Predicated region
  $region10: #{symbolic_net_forward.1} parent=0 // pred_check
    _
  $region11: #{symbolic_net_forward.1} parent=0 // pred_check_branch
    %14 = sbr.rel (0) target = $region13
  $region12: #{symbolic_net_forward.1} parent=0 // pred_region
    _
  $region13: #{symbolic_net_forward.1} parent=0 // pred_fallthru
    _
  // Predicated region
  $region14: #{symbolic_net_forward.1} parent=0 // pred_check
    _
  $region15: #{symbolic_net_forward.1} parent=0 // pred_check_branch
    %16 = sbr.rel (0) target = $region17
  $region16: #{symbolic_net_forward.1} parent=0 // pred_region
    _
  $region17: #{symbolic_net_forward.1} parent=0 // pred_fallthru
    _
  %v17 = vld [vmem:[%s3] sm:$0x1]
  %v18 = vld [vmem:[%s3 + $0x1] sm:$0x1]
  %v19 = vld [vmem:[%s3 + $0x2] sm:$0x1]
  %v20 = vld [vmem:[%s3 + $0x3] sm:$0x1]
  %v21 = vld [vmem:[%s3 + $0x4] sm:$0x1]
  %v22 = vld [vmem:[%s3 + $0x5] sm:$0x1]
  %v23 = vld [vmem:[%s0] sm:$0xff]
  %v24 = vld [vmem:[%s1] sm:$0xff]
  %v25 = vld [vmem:[%s1 + $0x8] sm:$0xff]
  %v26 = vld [vmem:[%s1 + $0x10] sm:$0xff]
  %v27 = vld [vmem:[%s1 + $0x18] sm:$0xff]
  %v28 = vld [vmem:[%s1 + $0x20] sm:$0xff]
  %v29 = vld [vmem:[%s1 + $0x28] sm:$0xff]
  %v30 = vld [vmem:[%s1 + $0x30] sm:$0xff]
  %v31 = vld [vmem:[%s1 + $0x38] sm:$0xff]
  %v32 = vld [vmem:[%s1 + $0x40] sm:$0xff]
  %v33 = vld [vmem:[%s1 + $0x48] sm:$0xff]
  %v34 = vld [vmem:[%s1 + $0x50] sm:$0xff]
  %v35 = vld [vmem:[%s1 + $0x58] sm:$0xff]
  %v36 = vld [vmem:[%s1 + $0x60] sm:$0xff]
  %v37 = vld [vmem:[%s1 + $0x68] sm:$0xff]
  %v38 = vld [vmem:[%s1 + $0x70] sm:$0xff]
  %v39 = vld [vmem:[%s1 + $0x78] sm:$0xff]
  %v40 = vld [vmem:[%s1 + $0x80] sm:$0xff]
  %v41 = vld [vmem:[%s1 + $0x88] sm:$0xff]
  %v42 = vld [vmem:[%s1 + $0x90] sm:$0xff]
  %v43 = vld [vmem:[%s1 + $0x98] sm:$0xff]
  %v44 = vld [vmem:[%s1 + $0xa0] sm:$0xff]
  %v45 = vld [vmem:[%s1 + $0xa8] sm:$0xff]
  %v46 = vld [vmem:[%s1 + $0xb0] sm:$0xff]
  %v47 = vld [vmem:[%s1 + $0xb8] sm:$0xff]
  %v48 = vld [vmem:[%s1 + $0xc0] sm:$0xff]
  %v49 = vld [vmem:[%s1 + $0xc8] sm:$0xff]
  %v50 = vld [vmem:[%s1 + $0xd0] sm:$0xff]
  %v51 = vld [vmem:[%s1 + $0xd8] sm:$0xff]
  %v52 = vld [vmem:[%s1 + $0xe0] sm:$0xff]
  %v53 = vld [vmem:[%s1 + $0xe8] sm:$0xff]
  %v54 = vld [vmem:[%s1 + $0xf0] sm:$0xff]
  %v55 = vld [vmem:[%s1 + $0xf8] sm:$0xff]
  %v56 = vld [vmem:[%s2] sm:$0x3]
  %v58 = vperm.slane %v56, 0
  %v59 = vperm.slane %v56, 1
  %62 = vmatpush.msra.mxu0 %v54
  %63 = vmatpush.msra.mxu0 %v52
  %64 = vmatpush.msra.mxu0 %v50
  %65 = vmatpush.msra.mxu0 %v48
  %66 = vmatpush.msra.mxu0 %v46
  %67 = vmatpush.msra.mxu0 %v44
  %68 = vmatpush.msra.mxu0 %v42
  %69 = vmatpush.msra.mxu0 %v40
  %70 = vmatpush.msra.mxu0 %v38
  %71 = vmatpush.msra.mxu0 %v36
  %72 = vmatpush.msra.mxu0 %v34
  %73 = vmatpush.msra.mxu0 %v32
  %74 = vmatpush.msra.mxu0 %v30
  %75 = vmatpush.msra.mxu0 %v28
  %76 = vmatpush.msra.mxu0 %v26
  %77 = vmatpush.msra.mxu0 %v24
  %78 = vmatmul.f32.gmra.mxu0 %v23
  %v79 = vpop.f32.mrf.mxu0
  %v80 = vadd.f32 %v58, %v79
  %81 = vdwg.mxu0
  %82 = vmatpush.msra.mxu0 %v55
  %83 = vmatpush.msra.mxu0 %v53
  %84 = vmatpush.msra.mxu0 %v51
  %85 = vmatpush.msra.mxu0 %v49
  %86 = vmatpush.msra.mxu0 %v47
  %87 = vmatpush.msra.mxu0 %v45
  %88 = vmatpush.msra.mxu0 %v43
  %89 = vmatpush.msra.mxu0 %v41
  %90 = vmatpush.msra.mxu0 %v39
  %91 = vmatpush.msra.mxu0 %v37
  %92 = vmatpush.msra.mxu0 %v35
  %93 = vmatpush.msra.mxu0 %v33
  %94 = vmatpush.msra.mxu0 %v31
  %95 = vmatpush.msra.mxu0 %v29
  %96 = vmatpush.msra.mxu0 %v27
  %97 = vmatpush.msra.mxu0 %v25
  %98 = vmatmul.f32.gmra.mxu0 %v23
  %v99 = vpop.f32.mrf.mxu0
  %v100 = vadd.f32 %v59, %v99
  %101 = vdwg.mxu0
  %v102 = vperm.slane %v17, 0
  %v103 = vmul.f32 %v102, %v80
  %v104 = vmul.f32 %v80, %v80
  %v105 = vperm.slane %v18, 0
  %v106 = vmul.f32 %v105, %v104
  %v107 = vadd.f32 %v103, %v106
  %v108 = vand.u32 2147483647, %v80
  %vm109 = vcmp.le.f32.partialorder %v108, 0.7853982
  %vm110 = vcmp.lt.s32.totalorder %v80, 0
  %v111 = vand.u32 %v80, 2139095040
  %v112 = vshrl.u32 %v111, 23
  %v113 = vsub.s32 %v112, 127
  %v114 = vand.u32 2147483647, %v80
  %v115 = vand.u32 %v114, 8388607
  %v116 = vor.u32 %v115, 8388608
  %v117 = vsub.s32 0, %v116
  %v118 = vadd.s32 %v113, 1
  %vm119 = vcmp.gt.s32.totalorder %v118, 0
  %v120 = vsel %vm119, %v118, 0
  %v121 = vshrl.u32 %v120, 5
  %v122 = vand.u32 %v120, 31
  %v123 = vsub.s32 32, %v122
  %v124 = vshrl.u32 683565275, %v123
  %v125 = vshll.u32 683565275, %v122
  %v126 = vshrl.u32 2475754826, %v123
  %v127 = vor.u32 %v125, %v126
  %v128 = vshll.u32 2475754826, %v122
  %v129 = vshrl.u32 2131351028, %v123
  %v130 = vor.u32 %v128, %v129
  %v131 = vshll.u32 2131351028, %v122
  %v132 = vshrl.u32 2102212464, %v123
  %v133 = vor.u32 %v131, %v132
  %v134 = vshll.u32 2102212464, %v122
  %v135 = vshrl.u32 920167782, %v123
  %v136 = vor.u32 %v134, %v135
  %v137 = vshll.u32 920167782, %v122
  %v138 = vshrl.u32 1326507024, %v123
  %v139 = vor.u32 %v137, %v138
  %vm140 = vcmp.lt.s32.totalorder %v121, 1
  %vm141 = vcmp.lt.s32.totalorder %v121, 2
  %vm142 = vcmp.lt.s32.totalorder %v121, 3
  %vm143 = vcmp.lt.s32.totalorder %v121, 4
  %v144 = vsel %vm140, %v124, %v127
  %v145 = vsel %vm143, %v133, 2102212464
  %v146 = vsel %vm142, %v130, %v145
  %v147 = vsel %vm141, %v144, %v146
  %v148 = vsel %vm140, %v127, %v130
  %v149 = vsel %vm143, %v136, 920167782
  %v150 = vsel %vm142, %v133, %v149
  %v151 = vsel %vm141, %v148, %v150
  %v152 = vsel %vm140, %v130, %v133
  %v153 = vsel %vm143, %v139, 1326507024
  %v154 = vsel %vm142, %v136, %v153
  %v155 = vsel %vm141, %v152, %v154
  %v156 = vshll.u32 %v116, 8
  %v157 = vand.u32 %v156, 65535
  %v158 = vshrl.u32 %v156, 16
  %v159 = vand.u32 %v155, 65535
  %v160 = vshrl.u32 %v155, 16
  %v161 = vmul.u32 %v157, %v159
  %v162 = vmul.u32 %v157, %v160
  %v163 = vmul.u32 %v158, %v159
  %v164 = vmul.u32 %v158, %v160
  %v165 = vshll.u32 %v162, 16
  %v166 = vshrl.u32 %v162, 16
  %v167 = vshll.u32 %v163, 16
  %v168 = vshrl.u32 %v163, 16
  %vm169 = vc.u32 %v161, %v165
  %v170 = vsel %vm169, 1, 0
  %v171 = vadd.s32 %v161, %v165
  %v172 = vadd.s32 %v164, %v170
  %vm173 = vc.u32 %v171, %v167
  %v174 = vsel %vm173, 1, 0
  %v175 = vadd.s32 %v171, %v167
  %v176 = vadd.s32 %v172, %v174
  %v177 = vadd.s32 %v176, %v166
  %v178 = vadd.s32 %v177, %v168
  %v179 = vand.u32 %v156, 65535
  %v180 = vshrl.u32 %v156, 16
  %v181 = vand.u32 %v151, 65535
  %v182 = vshrl.u32 %v151, 16
  %v183 = vmul.u32 %v179, %v181
  %v184 = vmul.u32 %v179, %v182
  %v185 = vmul.u32 %v180, %v181
  %v186 = vmul.u32 %v180, %v182
  %v187 = vshll.u32 %v184, 16
  %v188 = vshrl.u32 %v184, 16
  %v189 = vshll.u32 %v185, 16
  %v190 = vshrl.u32 %v185, 16
  %vm191 = vc.u32 %v183, %v187
  %v192 = vsel %vm191, 1, 0
  %v193 = vadd.s32 %v183, %v187
  %v194 = vadd.s32 %v186, %v192
  %vm195 = vc.u32 %v193, %v189
  %v196 = vsel %vm195, 1, 0
  %v197 = vadd.s32 %v193, %v189
  %v198 = vadd.s32 %v194, %v196
  %v199 = vadd.s32 %v198, %v188
  %v200 = vadd.s32 %v199, %v190
  %v201 = vmul.u32 %v156, %v147
  %v202 = vadd.s32 %v178, %v197
  %vm203 = vc.u32 %v178, %v197
  %v204 = vadd.s32 %v200, 1
  %v205 = vsel %vm203, %v204, %v200
  %v206 = vadd.s32 %v201, %v205
  %v207 = vadd.s32 %v206, 536870912
  %v208 = vshrl.u32 %v207, 30
  %v209 = vshll.u32 %v208, 30
  %v210 = vsub.s32 %v206, %v209
  %vm211 = vcmp.lt.s32.totalorder %v210, 0
  %v212 = vsub.s32 0, %v210
  %v213 = vsel %vm211, %v212, %v210
  %v214 = vclz %v213
  %v215 = vsub.s32 %v214, 2
  %vm216 = vcmp.gt.s32.totalorder 0, %v215
  %v217 = vsel %vm216, 0, %v215
  %v218 = vsub.s32 32, %v217
  %v219 = vshll.u32 %v210, %v217
  %v220 = vshrl.u32 %v202, %v218
  %v221 = vor.u32 %v219, %v220
  %v222 = vsub.s32 4294967266, %v217
  %v223 = vadd.s32 %v222, 127
  %v224 = vshll.u32 %v223, 23
  %v225 = vor.u32 4788187, %v224
  %v226 = vand.u32 2147483647, %v225
  %v228 = vcvt.s32.f32 %v221
  %v229 = vmul.f32 %v228, %v226
  %v230 = vxor.u32 %v229, 2147483648
  %v231 = vsel %vm110, %v230, %v229
  %v232 = vsub.s32 4, %v208
  %v233 = vsel %vm110, %v232, %v208
  %v234 = vsel %vm109, %v80, %v231
  %v235 = vsel %vm109, 0, %v233
  %v236 = vmul.f32 %v234, %v234
  %v237 = vmul.f32 %v236, -0.001358992
  %v238 = vadd.f32 %v237, 0.041655596
  %v239 = vmul.f32 %v236, %v238
  %v240 = vadd.f32 %v239, -0.4999988
  %v241 = vmul.f32 %v236, %v240
  %v242 = vadd.f32 1.0, %v241
  %v243 = vmul.f32 %v234, %v234
  %v244 = vmul.f32 %v243, -0.00019511016
  %v245 = vadd.f32 %v244, 0.008332121
  %v246 = vmul.f32 %v243, %v245
  %v247 = vadd.f32 %v246, -0.16666654
  %v248 = vmul.f32 %v243, %v247
  %v249 = vadd.f32 %v248, 1.0
  %v250 = vmul.f32 %v249, %v234
  %vm251 = vweird.f32 %v80
  %v252 = vadd.s32 %v235, 3
  %v253 = vand.u32 %v252, 3
  %vm254 = vcmp.lt.s32.totalorder %v253, 2
  %vm255 = vcmp.eq.s32.totalorder %v253, 0
  %v256 = vxor.u32 %v250, 2147483648
  %v257 = vsel %vm255, %v242, %v256
  %vm258 = vcmp.eq.s32.totalorder %v253, 2
  %v259 = vxor.u32 %v242, 2147483648
  %v260 = vsel %vm258, %v259, %v250
  %v261 = vsel %vm254, %v257, %v260
  %v262 = vsel %vm251, nan, %v261
  %v263 = vperm.slane %v19, 0
  %v264 = vmul.f32 %v263, %v262
  %v265 = vadd.f32 %v107, %v264
  %v266 = vand.u32 2147483647, %v80
  %vm267 = vcmp.le.f32.partialorder %v266, 0.7853982
  %vm268 = vcmp.lt.s32.totalorder %v80, 0
  %v269 = vand.u32 %v80, 2139095040
  %v270 = vshrl.u32 %v269, 23
  %v271 = vsub.s32 %v270, 127
  %v272 = vand.u32 2147483647, %v80
  %v273 = vand.u32 %v272, 8388607
  %v274 = vor.u32 %v273, 8388608
  %v275 = vsub.s32 0, %v274
  %v276 = vadd.s32 %v271, 1
  %vm277 = vcmp.gt.s32.totalorder %v276, 0
  %v278 = vsel %vm277, %v276, 0
  %v279 = vshrl.u32 %v278, 5
  %v280 = vand.u32 %v278, 31
  %v281 = vsub.s32 32, %v280
  %v282 = vshrl.u32 683565275, %v281
  %v283 = vshll.u32 683565275, %v280
  %v284 = vshrl.u32 2475754826, %v281
  %v285 = vor.u32 %v283, %v284
  %v286 = vshll.u32 2475754826, %v280
  %v287 = vshrl.u32 2131351028, %v281
  %v288 = vor.u32 %v286, %v287
  %v289 = vshll.u32 2131351028, %v280
  %v290 = vshrl.u32 2102212464, %v281
  %v291 = vor.u32 %v289, %v290
  %v292 = vshll.u32 2102212464, %v280
  %v293 = vshrl.u32 920167782, %v281
  %v294 = vor.u32 %v292, %v293
  %v295 = vshll.u32 920167782, %v280
  %v296 = vshrl.u32 1326507024, %v281
  %v297 = vor.u32 %v295, %v296
  %vm298 = vcmp.lt.s32.totalorder %v279, 1
  %vm299 = vcmp.lt.s32.totalorder %v279, 2
  %vm300 = vcmp.lt.s32.totalorder %v279, 3
  %vm301 = vcmp.lt.s32.totalorder %v279, 4
  %v302 = vsel %vm298, %v282, %v285
  %v303 = vsel %vm301, %v291, 2102212464
  %v304 = vsel %vm300, %v288, %v303
  %v305 = vsel %vm299, %v302, %v304
  %v306 = vsel %vm298, %v285, %v288
  %v307 = vsel %vm301, %v294, 920167782
  %v308 = vsel %vm300, %v291, %v307
  %v309 = vsel %vm299, %v306, %v308
  %v310 = vsel %vm298, %v288, %v291
  %v311 = vsel %vm301, %v297, 1326507024
  %v312 = vsel %vm300, %v294, %v311
  %v313 = vsel %vm299, %v310, %v312
  %v314 = vshll.u32 %v274, 8
  %v315 = vand.u32 %v314, 65535
  %v316 = vshrl.u32 %v314, 16
  %v317 = vand.u32 %v313, 65535
  %v318 = vshrl.u32 %v313, 16
  %v319 = vmul.u32 %v315, %v317
  %v320 = vmul.u32 %v315, %v318
  %v321 = vmul.u32 %v316, %v317
  %v322 = vmul.u32 %v316, %v318
  %v323 = vshll.u32 %v320, 16
  %v324 = vshrl.u32 %v320, 16
  %v325 = vshll.u32 %v321, 16
  %v326 = vshrl.u32 %v321, 16
  %vm327 = vc.u32 %v319, %v323
  %v328 = vsel %vm327, 1, 0
  %v329 = vadd.s32 %v319, %v323
  %v330 = vadd.s32 %v322, %v328
  %vm331 = vc.u32 %v329, %v325
  %v332 = vsel %vm331, 1, 0
  %v333 = vadd.s32 %v329, %v325
  %v334 = vadd.s32 %v330, %v332
  %v335 = vadd.s32 %v334, %v324
  %v336 = vadd.s32 %v335, %v326
  %v337 = vand.u32 %v314, 65535
  %v338 = vshrl.u32 %v314, 16
  %v339 = vand.u32 %v309, 65535
  %v340 = vshrl.u32 %v309, 16
  %v341 = vmul.u32 %v337, %v339
  %v342 = vmul.u32 %v337, %v340
  %v343 = vmul.u32 %v338, %v339
  %v344 = vmul.u32 %v338, %v340
  %v345 = vshll.u32 %v342, 16
  %v346 = vshrl.u32 %v342, 16
  %v347 = vshll.u32 %v343, 16
  %v348 = vshrl.u32 %v343, 16
  %vm349 = vc.u32 %v341, %v345
  %v350 = vsel %vm349, 1, 0
  %v351 = vadd.s32 %v341, %v345
  %v352 = vadd.s32 %v344, %v350
  %vm353 = vc.u32 %v351, %v347
  %v354 = vsel %vm353, 1, 0
  %v355 = vadd.s32 %v351, %v347
  %v356 = vadd.s32 %v352, %v354
  %v357 = vadd.s32 %v356, %v346
  %v358 = vadd.s32 %v357, %v348
  %v359 = vmul.u32 %v314, %v305
  %v360 = vadd.s32 %v336, %v355
  %vm361 = vc.u32 %v336, %v355
  %v362 = vadd.s32 %v358, 1
  %v363 = vsel %vm361, %v362, %v358
  %v364 = vadd.s32 %v359, %v363
  %v365 = vadd.s32 %v364, 536870912
  %v366 = vshrl.u32 %v365, 30
  %v367 = vshll.u32 %v366, 30
  %v368 = vsub.s32 %v364, %v367
  %vm369 = vcmp.lt.s32.totalorder %v368, 0
  %v370 = vsub.s32 0, %v368
  %v371 = vsel %vm369, %v370, %v368
  %v372 = vclz %v371
  %v373 = vsub.s32 %v372, 2
  %vm374 = vcmp.gt.s32.totalorder 0, %v373
  %v375 = vsel %vm374, 0, %v373
  %v376 = vsub.s32 32, %v375
  %v377 = vshll.u32 %v368, %v375
  %v378 = vshrl.u32 %v360, %v376
  %v379 = vor.u32 %v377, %v378
  %v380 = vsub.s32 4294967266, %v375
  %v381 = vadd.s32 %v380, 127
  %v382 = vshll.u32 %v381, 23
  %v383 = vor.u32 4788187, %v382
  %v384 = vand.u32 2147483647, %v383
  %v386 = vcvt.s32.f32 %v379
  %v387 = vmul.f32 %v386, %v384
  %v388 = vxor.u32 %v387, 2147483648
  %v389 = vsel %vm268, %v388, %v387
  %v390 = vsub.s32 4, %v366
  %v391 = vsel %vm268, %v390, %v366
  %v392 = vsel %vm267, %v80, %v389
  %v393 = vsel %vm267, 0, %v391
  %v394 = vmul.f32 %v392, %v392
  %v395 = vmul.f32 %v394, -0.001358992
  %v396 = vadd.f32 %v395, 0.041655596
  %v397 = vmul.f32 %v394, %v396
  %v398 = vadd.f32 %v397, -0.4999988
  %v399 = vmul.f32 %v394, %v398
  %v400 = vadd.f32 1.0, %v399
  %v401 = vmul.f32 %v392, %v392
  %v402 = vmul.f32 %v401, -0.00019511016
  %v403 = vadd.f32 %v402, 0.008332121
  %v404 = vmul.f32 %v401, %v403
  %v405 = vadd.f32 %v404, -0.16666654
  %v406 = vmul.f32 %v401, %v405
  %v407 = vadd.f32 %v406, 1.0
  %v408 = vmul.f32 %v407, %v392
  %vm409 = vweird.f32 %v80
  %v410 = vand.u32 %v393, 3
  %vm411 = vcmp.lt.s32.totalorder %v410, 2
  %vm412 = vcmp.eq.s32.totalorder %v410, 0
  %v413 = vxor.u32 %v408, 2147483648
  %v414 = vsel %vm412, %v400, %v413
  %vm415 = vcmp.eq.s32.totalorder %v410, 2
  %v416 = vxor.u32 %v400, 2147483648
  %v417 = vsel %vm415, %v416, %v408
  %v418 = vsel %vm411, %v414, %v417
  %v419 = vsel %vm409, nan, %v418
  %v420 = vperm.slane %v20, 0
  %v421 = vmul.f32 %v420, %v419
  %v422 = vadd.f32 %v265, %v421
  %v423 = vmul.f32 %v80, 0.5
  %v424 = vtanh.pop %v423
  %v425 = vadd.f32 %v424, 1.0
  %v426 = vmul.f32 %v425, 0.5
  %v427 = vperm.slane %v21, 0
  %v428 = vmul.f32 %v427, %v426
  %v429 = vadd.f32 %v422, %v428
  %v430 = vmul.f32 %v80, %v100
  %v431 = vperm.slane %v22, 0
  %v432 = vmul.f32 %v431, %v430
  %v433 = vadd.f32 %v429, %v432
  %s434 = scalar_lea.vmem %s1, 256
  %v435 = vld [vmem:[%s434] sm:$0xff]
  %v436 = vld [vmem:[%s434 + $0x8] sm:$0xff]
  %v437 = vld [vmem:[%s434 + $0x10] sm:$0xff]
  %v438 = vld [vmem:[%s434 + $0x18] sm:$0xff]
  %v439 = vld [vmem:[%s434 + $0x20] sm:$0xff]
  %v440 = vld [vmem:[%s434 + $0x28] sm:$0xff]
  %v441 = vld [vmem:[%s434 + $0x30] sm:$0xff]
  %v442 = vld [vmem:[%s434 + $0x38] sm:$0xff]
  %v443 = vld [vmem:[%s434 + $0x40] sm:$0xff]
  %v444 = vld [vmem:[%s434 + $0x48] sm:$0xff]
  %v445 = vld [vmem:[%s434 + $0x50] sm:$0xff]
  %v446 = vld [vmem:[%s434 + $0x58] sm:$0xff]
  %v447 = vld [vmem:[%s434 + $0x60] sm:$0xff]
  %v448 = vld [vmem:[%s434 + $0x68] sm:$0xff]
  %v449 = vld [vmem:[%s434 + $0x70] sm:$0xff]
  %v450 = vld [vmem:[%s434 + $0x78] sm:$0xff]
  %v451 = vld [vmem:[%s434 + $0x80] sm:$0xff]
  %v452 = vld [vmem:[%s434 + $0x88] sm:$0xff]
  %v453 = vld [vmem:[%s434 + $0x90] sm:$0xff]
  %v454 = vld [vmem:[%s434 + $0x98] sm:$0xff]
  %v455 = vld [vmem:[%s434 + $0xa0] sm:$0xff]
  %v456 = vld [vmem:[%s434 + $0xa8] sm:$0xff]
  %v457 = vld [vmem:[%s434 + $0xb0] sm:$0xff]
  %v458 = vld [vmem:[%s434 + $0xb8] sm:$0xff]
  %v459 = vld [vmem:[%s434 + $0xc0] sm:$0xff]
  %v460 = vld [vmem:[%s434 + $0xc8] sm:$0xff]
  %v461 = vld [vmem:[%s434 + $0xd0] sm:$0xff]
  %v462 = vld [vmem:[%s434 + $0xd8] sm:$0xff]
  %v463 = vld [vmem:[%s434 + $0xe0] sm:$0xff]
  %v464 = vld [vmem:[%s434 + $0xe8] sm:$0xff]
  %v465 = vld [vmem:[%s434 + $0xf0] sm:$0xff]
  %v466 = vld [vmem:[%s434 + $0xf8] sm:$0xff]
  %s467 = scalar_lea.vmem %s2, 2
  %v468 = vld [vmem:[%s467] sm:$0x3]
  %v470 = vperm.slane %v468, 0
  %v471 = vperm.slane %v468, 1
  %474 = vmatpush.msra.mxu0 %v465
  %475 = vmatpush.msra.mxu0 %v463
  %476 = vmatpush.msra.mxu0 %v461
  %477 = vmatpush.msra.mxu0 %v459
  %478 = vmatpush.msra.mxu0 %v457
  %479 = vmatpush.msra.mxu0 %v455
  %480 = vmatpush.msra.mxu0 %v453
  %481 = vmatpush.msra.mxu0 %v451
  %482 = vmatpush.msra.mxu0 %v449
  %483 = vmatpush.msra.mxu0 %v447
  %484 = vmatpush.msra.mxu0 %v445
  %485 = vmatpush.msra.mxu0 %v443
  %486 = vmatpush.msra.mxu0 %v441
  %487 = vmatpush.msra.mxu0 %v439
  %488 = vmatpush.msra.mxu0 %v437
  %489 = vmatpush.msra.mxu0 %v435
  %490 = vmatmul.f32.gmra.mxu0 %v433
  %v491 = vpop.f32.mrf.mxu0
  %v492 = vadd.f32 %v470, %v491
  %493 = vdwg.mxu0
  %494 = vmatpush.msra.mxu0 %v466
  %495 = vmatpush.msra.mxu0 %v464
  %496 = vmatpush.msra.mxu0 %v462
  %497 = vmatpush.msra.mxu0 %v460
  %498 = vmatpush.msra.mxu0 %v458
  %499 = vmatpush.msra.mxu0 %v456
  %500 = vmatpush.msra.mxu0 %v454
  %501 = vmatpush.msra.mxu0 %v452
  %502 = vmatpush.msra.mxu0 %v450
  %503 = vmatpush.msra.mxu0 %v448
  %504 = vmatpush.msra.mxu0 %v446
  %505 = vmatpush.msra.mxu0 %v444
  %506 = vmatpush.msra.mxu0 %v442
  %507 = vmatpush.msra.mxu0 %v440
  %508 = vmatpush.msra.mxu0 %v438
  %509 = vmatpush.msra.mxu0 %v436
  %510 = vmatmul.f32.gmra.mxu0 %v433
  %v511 = vpop.f32.mrf.mxu0
  %v512 = vadd.f32 %v471, %v511
  %513 = vdwg.mxu0
  %v514 = vmul.f32 %v102, %v492
  %v515 = vmul.f32 %v492, %v492
  %v516 = vmul.f32 %v105, %v515
  %v517 = vadd.f32 %v514, %v516
  %v518 = vand.u32 2147483647, %v492
  %vm519 = vcmp.le.f32.partialorder %v518, 0.7853982
  %vm520 = vcmp.lt.s32.totalorder %v492, 0
  %v521 = vand.u32 %v492, 2139095040
  %v522 = vshrl.u32 %v521, 23
  %v523 = vsub.s32 %v522, 127
  %v524 = vand.u32 2147483647, %v492
  %v525 = vand.u32 %v524, 8388607
  %v526 = vor.u32 %v525, 8388608
  %v527 = vsub.s32 0, %v526
  %v528 = vadd.s32 %v523, 1
  %vm529 = vcmp.gt.s32.totalorder %v528, 0
  %v530 = vsel %vm529, %v528, 0
  %v531 = vshrl.u32 %v530, 5
  %v532 = vand.u32 %v530, 31
  %v533 = vsub.s32 32, %v532
  %v534 = vshrl.u32 683565275, %v533
  %v535 = vshll.u32 683565275, %v532
  %v536 = vshrl.u32 2475754826, %v533
  %v537 = vor.u32 %v535, %v536
  %v538 = vshll.u32 2475754826, %v532
  %v539 = vshrl.u32 2131351028, %v533
  %v540 = vor.u32 %v538, %v539
  %v541 = vshll.u32 2131351028, %v532
  %v542 = vshrl.u32 2102212464, %v533
  %v543 = vor.u32 %v541, %v542
  %v544 = vshll.u32 2102212464, %v532
  %v545 = vshrl.u32 920167782, %v533
  %v546 = vor.u32 %v544, %v545
  %v547 = vshll.u32 920167782, %v532
  %v548 = vshrl.u32 1326507024, %v533
  %v549 = vor.u32 %v547, %v548
  %vm550 = vcmp.lt.s32.totalorder %v531, 1
  %vm551 = vcmp.lt.s32.totalorder %v531, 2
  %vm552 = vcmp.lt.s32.totalorder %v531, 3
  %vm553 = vcmp.lt.s32.totalorder %v531, 4
  %v554 = vsel %vm550, %v534, %v537
  %v555 = vsel %vm553, %v543, 2102212464
  %v556 = vsel %vm552, %v540, %v555
  %v557 = vsel %vm551, %v554, %v556
  %v558 = vsel %vm550, %v537, %v540
  %v559 = vsel %vm553, %v546, 920167782
  %v560 = vsel %vm552, %v543, %v559
  %v561 = vsel %vm551, %v558, %v560
  %v562 = vsel %vm550, %v540, %v543
  %v563 = vsel %vm553, %v549, 1326507024
  %v564 = vsel %vm552, %v546, %v563
  %v565 = vsel %vm551, %v562, %v564
  %v566 = vshll.u32 %v526, 8
  %v567 = vand.u32 %v566, 65535
  %v568 = vshrl.u32 %v566, 16
  %v569 = vand.u32 %v565, 65535
  %v570 = vshrl.u32 %v565, 16
  %v571 = vmul.u32 %v567, %v569
  %v572 = vmul.u32 %v567, %v570
  %v573 = vmul.u32 %v568, %v569
  %v574 = vmul.u32 %v568, %v570
  %v575 = vshll.u32 %v572, 16
  %v576 = vshrl.u32 %v572, 16
  %v577 = vshll.u32 %v573, 16
  %v578 = vshrl.u32 %v573, 16
  %vm579 = vc.u32 %v571, %v575
  %v580 = vsel %vm579, 1, 0
  %v581 = vadd.s32 %v571, %v575
  %v582 = vadd.s32 %v574, %v580
  %vm583 = vc.u32 %v581, %v577
  %v584 = vsel %vm583, 1, 0
  %v585 = vadd.s32 %v581, %v577
  %v586 = vadd.s32 %v582, %v584
  %v587 = vadd.s32 %v586, %v576
  %v588 = vadd.s32 %v587, %v578
  %v589 = vand.u32 %v566, 65535
  %v590 = vshrl.u32 %v566, 16
  %v591 = vand.u32 %v561, 65535
  %v592 = vshrl.u32 %v561, 16
  %v593 = vmul.u32 %v589, %v591
  %v594 = vmul.u32 %v589, %v592
  %v595 = vmul.u32 %v590, %v591
  %v596 = vmul.u32 %v590, %v592
  %v597 = vshll.u32 %v594, 16
  %v598 = vshrl.u32 %v594, 16
  %v599 = vshll.u32 %v595, 16
  %v600 = vshrl.u32 %v595, 16
  %vm601 = vc.u32 %v593, %v597
  %v602 = vsel %vm601, 1, 0
  %v603 = vadd.s32 %v593, %v597
  %v604 = vadd.s32 %v596, %v602
  %vm605 = vc.u32 %v603, %v599
  %v606 = vsel %vm605, 1, 0
  %v607 = vadd.s32 %v603, %v599
  %v608 = vadd.s32 %v604, %v606
  %v609 = vadd.s32 %v608, %v598
  %v610 = vadd.s32 %v609, %v600
  %v611 = vmul.u32 %v566, %v557
  %v612 = vadd.s32 %v588, %v607
  %vm613 = vc.u32 %v588, %v607
  %v614 = vadd.s32 %v610, 1
  %v615 = vsel %vm613, %v614, %v610
  %v616 = vadd.s32 %v611, %v615
  %v617 = vadd.s32 %v616, 536870912
  %v618 = vshrl.u32 %v617, 30
  %v619 = vshll.u32 %v618, 30
  %v620 = vsub.s32 %v616, %v619
  %vm621 = vcmp.lt.s32.totalorder %v620, 0
  %v622 = vsub.s32 0, %v620
  %v623 = vsel %vm621, %v622, %v620
  %v624 = vclz %v623
  %v625 = vsub.s32 %v624, 2
  %vm626 = vcmp.gt.s32.totalorder 0, %v625
  %v627 = vsel %vm626, 0, %v625
  %v628 = vsub.s32 32, %v627
  %v629 = vshll.u32 %v620, %v627
  %v630 = vshrl.u32 %v612, %v628
  %v631 = vor.u32 %v629, %v630
  %v632 = vsub.s32 4294967266, %v627
  %v633 = vadd.s32 %v632, 127
  %v634 = vshll.u32 %v633, 23
  %v635 = vor.u32 4788187, %v634
  %v636 = vand.u32 2147483647, %v635
  %v638 = vcvt.s32.f32 %v631
  %v639 = vmul.f32 %v638, %v636
  %v640 = vxor.u32 %v639, 2147483648
  %v641 = vsel %vm520, %v640, %v639
  %v642 = vsub.s32 4, %v618
  %v643 = vsel %vm520, %v642, %v618
  %v644 = vsel %vm519, %v492, %v641
  %v645 = vsel %vm519, 0, %v643
  %v646 = vmul.f32 %v644, %v644
  %v647 = vmul.f32 %v646, -0.001358992
  %v648 = vadd.f32 %v647, 0.041655596
  %v649 = vmul.f32 %v646, %v648
  %v650 = vadd.f32 %v649, -0.4999988
  %v651 = vmul.f32 %v646, %v650
  %v652 = vadd.f32 1.0, %v651
  %v653 = vmul.f32 %v644, %v644
  %v654 = vmul.f32 %v653, -0.00019511016
  %v655 = vadd.f32 %v654, 0.008332121
  %v656 = vmul.f32 %v653, %v655
  %v657 = vadd.f32 %v656, -0.16666654
  %v658 = vmul.f32 %v653, %v657
  %v659 = vadd.f32 %v658, 1.0
  %v660 = vmul.f32 %v659, %v644
  %vm661 = vweird.f32 %v492
  %v662 = vadd.s32 %v645, 3
  %v663 = vand.u32 %v662, 3
  %vm664 = vcmp.lt.s32.totalorder %v663, 2
  %vm665 = vcmp.eq.s32.totalorder %v663, 0
  %v666 = vxor.u32 %v660, 2147483648
  %v667 = vsel %vm665, %v652, %v666
  %vm668 = vcmp.eq.s32.totalorder %v663, 2
  %v669 = vxor.u32 %v652, 2147483648
  %v670 = vsel %vm668, %v669, %v660
  %v671 = vsel %vm664, %v667, %v670
  %v672 = vsel %vm661, nan, %v671
  %v673 = vmul.f32 %v263, %v672
  %v674 = vadd.f32 %v517, %v673
  %v675 = vand.u32 2147483647, %v492
  %vm676 = vcmp.le.f32.partialorder %v675, 0.7853982
  %vm677 = vcmp.lt.s32.totalorder %v492, 0
  %v678 = vand.u32 %v492, 2139095040
  %v679 = vshrl.u32 %v678, 23
  %v680 = vsub.s32 %v679, 127
  %v681 = vand.u32 2147483647, %v492
  %v682 = vand.u32 %v681, 8388607
  %v683 = vor.u32 %v682, 8388608
  %v684 = vsub.s32 0, %v683
  %v685 = vadd.s32 %v680, 1
  %vm686 = vcmp.gt.s32.totalorder %v685, 0
  %v687 = vsel %vm686, %v685, 0
  %v688 = vshrl.u32 %v687, 5
  %v689 = vand.u32 %v687, 31
  %v690 = vsub.s32 32, %v689
  %v691 = vshrl.u32 683565275, %v690
  %v692 = vshll.u32 683565275, %v689
  %v693 = vshrl.u32 2475754826, %v690
  %v694 = vor.u32 %v692, %v693
  %v695 = vshll.u32 2475754826, %v689
  %v696 = vshrl.u32 2131351028, %v690
  %v697 = vor.u32 %v695, %v696
  %v698 = vshll.u32 2131351028, %v689
  %v699 = vshrl.u32 2102212464, %v690
  %v700 = vor.u32 %v698, %v699
  %v701 = vshll.u32 2102212464, %v689
  %v702 = vshrl.u32 920167782, %v690
  %v703 = vor.u32 %v701, %v702
  %v704 = vshll.u32 920167782, %v689
  %v705 = vshrl.u32 1326507024, %v690
  %v706 = vor.u32 %v704, %v705
  %vm707 = vcmp.lt.s32.totalorder %v688, 1
  %vm708 = vcmp.lt.s32.totalorder %v688, 2
  %vm709 = vcmp.lt.s32.totalorder %v688, 3
  %vm710 = vcmp.lt.s32.totalorder %v688, 4
  %v711 = vsel %vm707, %v691, %v694
  %v712 = vsel %vm710, %v700, 2102212464
  %v713 = vsel %vm709, %v697, %v712
  %v714 = vsel %vm708, %v711, %v713
  %v715 = vsel %vm707, %v694, %v697
  %v716 = vsel %vm710, %v703, 920167782
  %v717 = vsel %vm709, %v700, %v716
  %v718 = vsel %vm708, %v715, %v717
  %v719 = vsel %vm707, %v697, %v700
  %v720 = vsel %vm710, %v706, 1326507024
  %v721 = vsel %vm709, %v703, %v720
  %v722 = vsel %vm708, %v719, %v721
  %v723 = vshll.u32 %v683, 8
  %v724 = vand.u32 %v723, 65535
  %v725 = vshrl.u32 %v723, 16
  %v726 = vand.u32 %v722, 65535
  %v727 = vshrl.u32 %v722, 16
  %v728 = vmul.u32 %v724, %v726
  %v729 = vmul.u32 %v724, %v727
  %v730 = vmul.u32 %v725, %v726
  %v731 = vmul.u32 %v725, %v727
  %v732 = vshll.u32 %v729, 16
  %v733 = vshrl.u32 %v729, 16
  %v734 = vshll.u32 %v730, 16
  %v735 = vshrl.u32 %v730, 16
  %vm736 = vc.u32 %v728, %v732
  %v737 = vsel %vm736, 1, 0
  %v738 = vadd.s32 %v728, %v732
  %v739 = vadd.s32 %v731, %v737
  %vm740 = vc.u32 %v738, %v734
  %v741 = vsel %vm740, 1, 0
  %v742 = vadd.s32 %v738, %v734
  %v743 = vadd.s32 %v739, %v741
  %v744 = vadd.s32 %v743, %v733
  %v745 = vadd.s32 %v744, %v735
  %v746 = vand.u32 %v723, 65535
  %v747 = vshrl.u32 %v723, 16
  %v748 = vand.u32 %v718, 65535
  %v749 = vshrl.u32 %v718, 16
  %v750 = vmul.u32 %v746, %v748
  %v751 = vmul.u32 %v746, %v749
  %v752 = vmul.u32 %v747, %v748
  %v753 = vmul.u32 %v747, %v749
  %v754 = vshll.u32 %v751, 16
  %v755 = vshrl.u32 %v751, 16
  %v756 = vshll.u32 %v752, 16
  %v757 = vshrl.u32 %v752, 16
  %vm758 = vc.u32 %v750, %v754
  %v759 = vsel %vm758, 1, 0
  %v760 = vadd.s32 %v750, %v754
  %v761 = vadd.s32 %v753, %v759
  %vm762 = vc.u32 %v760, %v756
  %v763 = vsel %vm762, 1, 0
  %v764 = vadd.s32 %v760, %v756
  %v765 = vadd.s32 %v761, %v763
  %v766 = vadd.s32 %v765, %v755
  %v767 = vadd.s32 %v766, %v757
  %v768 = vmul.u32 %v723, %v714
  %v769 = vadd.s32 %v745, %v764
  %vm770 = vc.u32 %v745, %v764
  %v771 = vadd.s32 %v767, 1
  %v772 = vsel %vm770, %v771, %v767
  %v773 = vadd.s32 %v768, %v772
  %v774 = vadd.s32 %v773, 536870912
  %v775 = vshrl.u32 %v774, 30
  %v776 = vshll.u32 %v775, 30
  %v777 = vsub.s32 %v773, %v776
  %vm778 = vcmp.lt.s32.totalorder %v777, 0
  %v779 = vsub.s32 0, %v777
  %v780 = vsel %vm778, %v779, %v777
  %v781 = vclz %v780
  %v782 = vsub.s32 %v781, 2
  %vm783 = vcmp.gt.s32.totalorder 0, %v782
  %v784 = vsel %vm783, 0, %v782
  %v785 = vsub.s32 32, %v784
  %v786 = vshll.u32 %v777, %v784
  %v787 = vshrl.u32 %v769, %v785
  %v788 = vor.u32 %v786, %v787
  %v789 = vsub.s32 4294967266, %v784
  %v790 = vadd.s32 %v789, 127
  %v791 = vshll.u32 %v790, 23
  %v792 = vor.u32 4788187, %v791
  %v793 = vand.u32 2147483647, %v792
  %v795 = vcvt.s32.f32 %v788
  %v796 = vmul.f32 %v795, %v793
  %v797 = vxor.u32 %v796, 2147483648
  %v798 = vsel %vm677, %v797, %v796
  %v799 = vsub.s32 4, %v775
  %v800 = vsel %vm677, %v799, %v775
  %v801 = vsel %vm676, %v492, %v798
  %v802 = vsel %vm676, 0, %v800
  %v803 = vmul.f32 %v801, %v801
  %v804 = vmul.f32 %v803, -0.001358992
  %v805 = vadd.f32 %v804, 0.041655596
  %v806 = vmul.f32 %v803, %v805
  %v807 = vadd.f32 %v806, -0.4999988
  %v808 = vmul.f32 %v803, %v807
  %v809 = vadd.f32 1.0, %v808
  %v810 = vmul.f32 %v801, %v801
  %v811 = vmul.f32 %v810, -0.00019511016
  %v812 = vadd.f32 %v811, 0.008332121
  %v813 = vmul.f32 %v810, %v812
  %v814 = vadd.f32 %v813, -0.16666654
  %v815 = vmul.f32 %v810, %v814
  %v816 = vadd.f32 %v815, 1.0
  %v817 = vmul.f32 %v816, %v801
  %vm818 = vweird.f32 %v492
  %v819 = vand.u32 %v802, 3
  %vm820 = vcmp.lt.s32.totalorder %v819, 2
  %vm821 = vcmp.eq.s32.totalorder %v819, 0
  %v822 = vxor.u32 %v817, 2147483648
  %v823 = vsel %vm821, %v809, %v822
  %vm824 = vcmp.eq.s32.totalorder %v819, 2
  %v825 = vxor.u32 %v809, 2147483648
  %v826 = vsel %vm824, %v825, %v817
  %v827 = vsel %vm820, %v823, %v826
  %v828 = vsel %vm818, nan, %v827
  %v829 = vmul.f32 %v420, %v828
  %v830 = vadd.f32 %v674, %v829
  %v831 = vmul.f32 %v492, 0.5
  %v832 = vtanh.pop %v831
  %v833 = vadd.f32 %v832, 1.0
  %v834 = vmul.f32 %v833, 0.5
  %v835 = vmul.f32 %v427, %v834
  %v836 = vadd.f32 %v830, %v835
  %v837 = vmul.f32 %v492, %v512
  %v838 = vmul.f32 %v431, %v837
  %v839 = vadd.f32 %v836, %v838
  %s840 = scalar_lea.vmem %s1, 512
  %v841 = vld [vmem:[%s840] sm:$0xff]
  %v842 = vld [vmem:[%s840 + $0x10] sm:$0xff]
  %v843 = vld [vmem:[%s840 + $0x20] sm:$0xff]
  %v844 = vld [vmem:[%s840 + $0x30] sm:$0xff]
  %v845 = vld [vmem:[%s840 + $0x40] sm:$0xff]
  %v846 = vld [vmem:[%s840 + $0x50] sm:$0xff]
  %v847 = vld [vmem:[%s840 + $0x60] sm:$0xff]
  %v848 = vld [vmem:[%s840 + $0x70] sm:$0xff]
  %v849 = vld [vmem:[%s840 + $0x80] sm:$0xff]
  %v850 = vld [vmem:[%s840 + $0x90] sm:$0xff]
  %v851 = vld [vmem:[%s840 + $0xa0] sm:$0xff]
  %v852 = vld [vmem:[%s840 + $0xb0] sm:$0xff]
  %v853 = vld [vmem:[%s840 + $0xc0] sm:$0xff]
  %v854 = vld [vmem:[%s840 + $0xd0] sm:$0xff]
  %v855 = vld [vmem:[%s840 + $0xe0] sm:$0xff]
  %v856 = vld [vmem:[%s840 + $0xf0] sm:$0xff]
  %s857 = scalar_lea.vmem %s2, 4
  %v858 = vld [vmem:[%s857] sm:$0x3]
  %v860 = vperm.slane %v858, 0
  %862 = vmatpush.msra.mxu0 %v856
  %863 = vmatpush.msra.mxu0 %v855
  %864 = vmatpush.msra.mxu0 %v854
  %865 = vmatpush.msra.mxu0 %v853
  %866 = vmatpush.msra.mxu0 %v852
  %867 = vmatpush.msra.mxu0 %v851
  %868 = vmatpush.msra.mxu0 %v850
  %869 = vmatpush.msra.mxu0 %v849
  %870 = vmatpush.msra.mxu0 %v848
  %871 = vmatpush.msra.mxu0 %v847
  %872 = vmatpush.msra.mxu0 %v846
  %873 = vmatpush.msra.mxu0 %v845
  %874 = vmatpush.msra.mxu0 %v844
  %875 = vmatpush.msra.mxu0 %v843
  %876 = vmatpush.msra.mxu0 %v842
  %877 = vmatpush.msra.mxu0 %v841
  %878 = vmatmul.f32.gmra.mxu0 %v839
  %v879 = vpop.f32.mrf.mxu0
  %v880 = vadd.f32 %v860, %v879
  %881 = vdwg.mxu0
  %882 = vst [vmem:[%s4] sm:$0xff] %v880
  // Predicated region
  $region18: #{symbolic_net_forward.1} parent=0 // pred_check
    _
  $region19: #{symbolic_net_forward.1} parent=0 // pred_check_branch
    %884 = sbr.rel (0) target = $region21
  $region20: #{symbolic_net_forward.1} parent=0 // pred_region
    _
  $region21: #{symbolic_net_forward.1} parent=0 // pred_fallthru
    _
  // Predicated region
  $region22: #{symbolic_net_forward.1} parent=0 // pred_check
    _
  $region23: #{symbolic_net_forward.1} parent=0 // pred_check_branch
    %886 = sbr.rel (0) target = $region25
  $region24: #{symbolic_net_forward.1} parent=0 // pred_region
    _
  $region25: #{symbolic_net_forward.1} parent=0 // pred_fallthru
    _

</llo_original>
